<compile_context>
chip_gen: v7x
topology: tpu7x:2x2x1
jax: 0.10.0
libtpu: 0.0.40
codegen_flags: <defaults>
</compile_context>

<pallas_src>
import jax
import jax.numpy as jnp
import numpy as np
from jax import lax
from jax.experimental import pallas as pl
from jax.experimental.pallas import tpu as pltpu

SEQ = 8     # sequence length
IL = 1      # input size
HL = 32     # hidden size (small, lane-friendly; module default is 100)
OL = 1      # output size


def lstm_kernel(x_ref, w_ih_ref, w_hh_ref, b_ref, scale_ref, offset_ref,
                w_lin_ref, b_lin_ref, out_ref):
    """Full LSTM recurrence over SEQ steps + final linear layer, single invocation.

    x_ref:      (SEQ, IL)          w_ih_ref: (IL, 4*HL)   b_ref: (1, 4*HL)
    w_hh_ref:   (HL, 4*HL)         scale/offset_ref: (1, 4*HL)
    w_lin_ref:  (1, HL)            b_lin_ref: (1, OL)     out_ref: (1, OL)
    Gate column order is PyTorch's i, f, g, o.  The i/f/o columns of the packed
    weights/bias are pre-scaled by 0.5 so sigmoid(z) = 0.5*tanh(z/2) + 0.5 is
    recovered with one FMA from a single tanh over the packed gate vreg.
    """
    seq = x_ref.shape[0]
    hl = w_hh_ref.shape[0]

    # Hoisted input projection + bias (valid only for IL == 1, asserted at pack
    # time): (SEQ,1) * (1,4*HL) + (1,4*HL) -> (SEQ,4*HL).  Pure VPU broadcast,
    # one vreg, no MXU, no VMEM scratch round trip.
    ih = x_ref[...] * w_ih_ref[...] + b_ref[...]

    w_hh = w_hh_ref[...]          # (HL, 4*HL), loop-invariant, stays in vregs
    scale = scale_ref[...]        # 0.5 on i/f/o lanes, 1.0 on g lanes
    offset = offset_ref[...]      # 0.5 on i/f/o lanes, 0.0 on g lanes

    h = jnp.zeros((1, hl), jnp.float32)
    c = jnp.zeros((1, hl), jnp.float32)

    # Fully static unroll (SEQ == 8): static row slices, maximum LLO visibility.
    # TODO(synk): if the bundle dump shows the (32,128) RHS being re-streamed each
    # step, switch to pltpu.matmul_push_rhs / matmul_acc_lhs / matmul_pop to keep
    # W_hh weight-stationary in the MXU across the recurrence.
    for t in range(seq):
        # Single packed recurrent matmul: (1,HL) @ (HL,4*HL) -> one 128-lane vreg.
        gates = ih[t:t + 1, :] + jnp.dot(
            h, w_hh,
            preferred_element_type=jnp.float32,
            precision=lax.Precision.DEFAULT)

        # ONE EUP transcendental for all four gates, then a single FMA to turn the
        # pre-scaled i/f/o lanes back into sigmoids (g lanes pass through as tanh).
        act = jnp.tanh(gates) * scale + offset

        i_g = act[:, 0 * hl:1 * hl]
        f_g = act[:, 1 * hl:2 * hl]
        g_g = act[:, 2 * hl:3 * hl]
        o_g = act[:, 3 * hl:4 * hl]

        c = f_g * c + i_g * g_g
        h = o_g * jnp.tanh(c)     # unavoidable second tanh (on c), EUP slot

    # Final linear (OL == 1): VPU multiply + lane reduce — avoids a second full
    # MXU fill/drain for an N=1 result at the very tail of the kernel.
    out_ref[...] = (jnp.sum(h * w_lin_ref[...], axis=-1, keepdims=True)
                    + b_lin_ref[...])


def pack_params(weight_ih, weight_hh, bias_ih, bias_hh, lin_w, lin_b):
    """One-time repack of PyTorch-layout LSTM/Linear weights into kernel layout.

    PyTorch: weight_ih (4*HL, IL), weight_hh (4*HL, HL), biases (4*HL,) with gate
    row-blocks in order i, f, g, o; lin_w (OL, HL), lin_b (OL,).
    Kernel:  w_ih (IL, 4*HL), w_hh (HL, 4*HL), b (1, 4*HL) with the i/f/o columns
    pre-scaled by 0.5 (sigmoid-via-tanh), plus (1, 4*HL) activation scale/offset,
    w_lin as a (1, HL) row and b_lin (1, OL).
    """
    il = weight_ih.shape[1]
    hl = weight_hh.shape[1]
    ol = lin_w.shape[0]
    # Layout assumptions (correctness review): the hoisted broadcast projection
    # requires IL == 1 and the lane-reduce tail requires OL == 1.
    assert il == 1, "kernel's hoisted input projection assumes input size IL == 1"
    assert ol == 1, "kernel's lane-reduce output path assumes output size OL == 1"

    # sigmoid(z) = 0.5*tanh(z/2) + 0.5  ->  scale i/f/o gate pre-activations by 0.5
    # (exact in fp: power of two), recover with a single scale/offset FMA in-kernel.
    gate_pre = np.full((4 * hl,), 0.5, np.float32)
    gate_pre[2 * hl:3 * hl] = 1.0                       # g gate: plain tanh

    act_scale = np.full((1, 4 * hl), 0.5, np.float32)
    act_scale[:, 2 * hl:3 * hl] = 1.0
    act_offset = np.full((1, 4 * hl), 0.5, np.float32)
    act_offset[:, 2 * hl:3 * hl] = 0.0

    gate_pre = jnp.asarray(gate_pre)
    w_ih_p = jnp.asarray(weight_ih, jnp.float32).T * gate_pre          # (IL, 4*HL)
    w_hh_p = jnp.asarray(weight_hh, jnp.float32).T * gate_pre          # (HL, 4*HL)
    b_p = ((jnp.asarray(bias_ih, jnp.float32)
            + jnp.asarray(bias_hh, jnp.float32)) * gate_pre).reshape(1, 4 * hl)
    w_lin_p = jnp.asarray(lin_w, jnp.float32).reshape(1, hl)           # (1, HL)
    b_lin_p = jnp.asarray(lin_b, jnp.float32).reshape(1, ol)           # (1, OL)
    return (w_ih_p, w_hh_p, b_p, jnp.asarray(act_scale), jnp.asarray(act_offset),
            w_lin_p, b_lin_p)


@jax.jit
def lstm_forward_packed(x, w_ih_p, w_hh_p, b_p, scale_p, offset_p,
                        w_lin_p, b_lin_p):
    """x: (SEQ, IL) float32; pre-packed weights (see pack_params).
    Returns (OL,) -- prediction for the last time step, zero initial (h, c)."""
    ol = b_lin_p.shape[1]
    vmem = pl.BlockSpec(memory_space=pltpu.MemorySpace.VMEM)
    out = pl.pallas_call(
        lstm_kernel,
        out_shape=jax.ShapeDtypeStruct((1, ol), jnp.float32),
        in_specs=[vmem] * 8,
        out_specs=vmem,
    )(x, w_ih_p, w_hh_p, b_p, scale_p, offset_p, w_lin_p, b_lin_p)
    return out.reshape(ol)
    # TODO(synk): for v7x throughput, batch >=2 independent sequences with a
    # leading "parallel" grid axis so both TensorCores are used; batch=1 here
    # matches the PyTorch module semantics.
    # TODO(synk): the PyTorch module persists self.hidden_cell across forward
    # calls; to reproduce that, pass (h0, c0) in and return (h, c) as outputs.


def lstm_reference(x, weight_ih, weight_hh, bias_ih, bias_hh, lin_w, lin_b):
    """Pure-JAX reference matching torch.nn.LSTM + nn.Linear semantics."""
    seq, il = x.shape
    hl = weight_hh.shape[1]
    h = jnp.zeros((1, hl), jnp.float32)
    c = jnp.zeros((1, hl), jnp.float32)
    for t in range(seq):
        x_t = x[t:t + 1, :]                                  # (1, il)
        gates = x_t @ weight_ih.T + h @ weight_hh.T + bias_ih + bias_hh
        i_g = jax.nn.sigmoid(gates[:, 0 * hl:1 * hl])
        f_g = jax.nn.sigmoid(gates[:, 1 * hl:2 * hl])
        g_g = jnp.tanh(gates[:, 2 * hl:3 * hl])
        o_g = jax.nn.sigmoid(gates[:, 3 * hl:4 * hl])
        c = f_g * c + i_g * g_g
        h = o_g * jnp.tanh(c)
    pred = h @ lin_w.T + lin_b
    return pred.reshape(-1)


if __name__ == "__main__":
    key = jax.random.PRNGKey(0)
    k = jax.random.split(key, 8)
    bound = 1.0 / np.sqrt(HL)

    # Deterministic parameter init (PyTorch-style uniform(-1/sqrt(hl), 1/sqrt(hl))).
    weight_ih = jax.random.uniform(k[0], (4 * HL, IL), jnp.float32, -bound, bound)
    weight_hh = jax.random.uniform(k[1], (4 * HL, HL), jnp.float32, -bound, bound)
    bias_ih = jax.random.uniform(k[2], (4 * HL,), jnp.float32, -bound, bound)
    bias_hh = jax.random.uniform(k[3], (4 * HL,), jnp.float32, -bound, bound)
    lin_w = jax.random.uniform(k[4], (OL, HL), jnp.float32, -bound, bound)
    lin_b = jax.random.uniform(k[5], (OL,), jnp.float32, -bound, bound)

    # Input sequence: (seq, il) -- PyTorch module views it as (seq, batch=1, il).
    x = jax.random.normal(k[6], (SEQ, IL), jnp.float32)

    # Pack weights ONCE, outside the per-call path.
    packed = pack_params(weight_ih, weight_hh, bias_ih, bias_hh, lin_w, lin_b)
    packed = jax.tree_util.tree_map(jax.block_until_ready, packed)

    pred = lstm_forward_packed(x, *packed)
    jax.block_until_ready(pred)

    ref = lstm_reference(x, weight_ih, weight_hh, bias_ih, bias_hh, lin_w, lin_b)
    np.testing.assert_allclose(np.asarray(pred), np.asarray(ref), rtol=1e-5, atol=1e-5)

    print("KERNEL_OK")
</pallas_src>

<mosaic_0001>
module attributes {stable_mosaic.version = 11 : i64} {
  func.func @lstm_kernel(%arg0: memref<8x1xf32, #tpu.memory_space<vmem>>, %arg1: memref<1x128xf32, #tpu.memory_space<vmem>>, %arg2: memref<32x128xf32, #tpu.memory_space<vmem>>, %arg3: memref<1x128xf32, #tpu.memory_space<vmem>>, %arg4: memref<1x128xf32, #tpu.memory_space<vmem>>, %arg5: memref<1x128xf32, #tpu.memory_space<vmem>>, %arg6: memref<1x32xf32, #tpu.memory_space<vmem>>, %arg7: memref<1x1xf32, #tpu.memory_space<vmem>>, %arg8: memref<1x1xf32, #tpu.memory_space<vmem>>) attributes {dimension_semantics = [], scalar_prefetch = 0 : i64, scratch_operands = 0 : i64, tpu.core_type = #tpu.core_type<tc>} {
    %c0 = arith.constant 0 : index
    %c0_0 = arith.constant 0 : index
    %0 = vector.load %arg0[%c0, %c0_0] : memref<8x1xf32, #tpu.memory_space<vmem>>, vector<8x1xf32>
    %c0_1 = arith.constant 0 : index
    %c0_2 = arith.constant 0 : index
    %1 = vector.load %arg1[%c0_1, %c0_2] : memref<1x128xf32, #tpu.memory_space<vmem>>, vector<1x128xf32>
    %2 = vector.broadcast %0 : vector<8x1xf32> to vector<8x128xf32>
    %3 = vector.broadcast %1 : vector<1x128xf32> to vector<8x128xf32>
    %4 = arith.mulf %2, %3 : vector<8x128xf32>
    %c0_3 = arith.constant 0 : index
    %c0_4 = arith.constant 0 : index
    %5 = vector.load %arg3[%c0_3, %c0_4] : memref<1x128xf32, #tpu.memory_space<vmem>>, vector<1x128xf32>
    %6 = vector.broadcast %5 : vector<1x128xf32> to vector<8x128xf32>
    %7 = arith.addf %4, %6 : vector<8x128xf32>
    %c0_5 = arith.constant 0 : index
    %c0_6 = arith.constant 0 : index
    %8 = vector.load %arg2[%c0_5, %c0_6] : memref<32x128xf32, #tpu.memory_space<vmem>>, vector<32x128xf32>
    %c0_7 = arith.constant 0 : index
    %c0_8 = arith.constant 0 : index
    %9 = vector.load %arg4[%c0_7, %c0_8] : memref<1x128xf32, #tpu.memory_space<vmem>>, vector<1x128xf32>
    %c0_9 = arith.constant 0 : index
    %c0_10 = arith.constant 0 : index
    %10 = vector.load %arg5[%c0_9, %c0_10] : memref<1x128xf32, #tpu.memory_space<vmem>>, vector<1x128xf32>
    %cst = arith.constant 0.000000e+00 : f32
    %11 = vector.broadcast %cst : f32 to vector<1x32xf32>
    %cst_11 = arith.constant 0.000000e+00 : f32
    %12 = vector.broadcast %cst_11 : f32 to vector<1x32xf32>
    %13 = vector.extract_strided_slice %7 {offsets = [0, 0], sizes = [1, 128], strides = [1, 1]} : vector<8x128xf32> to vector<1x128xf32>
    %cst_12 = arith.constant dense<0.000000e+00> : vector<1x128xf32>
    %14 = tpu.matmul %11, %8, %cst_12 {dimension_numbers = #tpu.dot_dimension_numbers<[1], [0], [0], [1], [0, 0, 1, 1], [], []>} : vector<1x32xf32>, vector<32x128xf32>, vector<1x128xf32> -> vector<1x128xf32>
    %15 = arith.addf %13, %14 : vector<1x128xf32>
    %16 = math.tanh %15 : vector<1x128xf32>
    %17 = arith.mulf %16, %9 : vector<1x128xf32>
    %18 = arith.addf %17, %10 : vector<1x128xf32>
    %19 = vector.extract_strided_slice %18 {offsets = [0, 0], sizes = [1, 32], strides = [1, 1]} : vector<1x128xf32> to vector<1x32xf32>
    %20 = vector.extract_strided_slice %18 {offsets = [0, 32], sizes = [1, 32], strides = [1, 1]} : vector<1x128xf32> to vector<1x32xf32>
    %21 = vector.extract_strided_slice %18 {offsets = [0, 64], sizes = [1, 32], strides = [1, 1]} : vector<1x128xf32> to vector<1x32xf32>
    %22 = vector.extract_strided_slice %18 {offsets = [0, 96], sizes = [1, 32], strides = [1, 1]} : vector<1x128xf32> to vector<1x32xf32>
    %23 = arith.mulf %20, %12 : vector<1x32xf32>
    %24 = arith.mulf %19, %21 : vector<1x32xf32>
    %25 = arith.addf %23, %24 : vector<1x32xf32>
    %26 = math.tanh %25 : vector<1x32xf32>
    %27 = arith.mulf %22, %26 : vector<1x32xf32>
    %28 = vector.extract_strided_slice %7 {offsets = [1, 0], sizes = [1, 128], strides = [1, 1]} : vector<8x128xf32> to vector<1x128xf32>
    %cst_13 = arith.constant dense<0.000000e+00> : vector<1x128xf32>
    %29 = tpu.matmul %27, %8, %cst_13 {dimension_numbers = #tpu.dot_dimension_numbers<[1], [0], [0], [1], [0, 0, 1, 1], [], []>} : vector<1x32xf32>, vector<32x128xf32>, vector<1x128xf32> -> vector<1x128xf32>
    %30 = arith.addf %28, %29 : vector<1x128xf32>
    %31 = math.tanh %30 : vector<1x128xf32>
    %32 = arith.mulf %31, %9 : vector<1x128xf32>
    %33 = arith.addf %32, %10 : vector<1x128xf32>
    %34 = vector.extract_strided_slice %33 {offsets = [0, 0], sizes = [1, 32], strides = [1, 1]} : vector<1x128xf32> to vector<1x32xf32>
    %35 = vector.extract_strided_slice %33 {offsets = [0, 32], sizes = [1, 32], strides = [1, 1]} : vector<1x128xf32> to vector<1x32xf32>
    %36 = vector.extract_strided_slice %33 {offsets = [0, 64], sizes = [1, 32], strides = [1, 1]} : vector<1x128xf32> to vector<1x32xf32>
    %37 = vector.extract_strided_slice %33 {offsets = [0, 96], sizes = [1, 32], strides = [1, 1]} : vector<1x128xf32> to vector<1x32xf32>
    %38 = arith.mulf %35, %25 : vector<1x32xf32>
    %39 = arith.mulf %34, %36 : vector<1x32xf32>
    %40 = arith.addf %38, %39 : vector<1x32xf32>
    %41 = math.tanh %40 : vector<1x32xf32>
    %42 = arith.mulf %37, %41 : vector<1x32xf32>
    %43 = vector.extract_strided_slice %7 {offsets = [2, 0], sizes = [1, 128], strides = [1, 1]} : vector<8x128xf32> to vector<1x128xf32>
    %cst_14 = arith.constant dense<0.000000e+00> : vector<1x128xf32>
    %44 = tpu.matmul %42, %8, %cst_14 {dimension_numbers = #tpu.dot_dimension_numbers<[1], [0], [0], [1], [0, 0, 1, 1], [], []>} : vector<1x32xf32>, vector<32x128xf32>, vector<1x128xf32> -> vector<1x128xf32>
    %45 = arith.addf %43, %44 : vector<1x128xf32>
    %46 = math.tanh %45 : vector<1x128xf32>
    %47 = arith.mulf %46, %9 : vector<1x128xf32>
    %48 = arith.addf %47, %10 : vector<1x128xf32>
    %49 = vector.extract_strided_slice %48 {offsets = [0, 0], sizes = [1, 32], strides = [1, 1]} : vector<1x128xf32> to vector<1x32xf32>
    %50 = vector.extract_strided_slice %48 {offsets = [0, 32], sizes = [1, 32], strides = [1, 1]} : vector<1x128xf32> to vector<1x32xf32>
    %51 = vector.extract_strided_slice %48 {offsets = [0, 64], sizes = [1, 32], strides = [1, 1]} : vector<1x128xf32> to vector<1x32xf32>
    %52 = vector.extract_strided_slice %48 {offsets = [0, 96], sizes = [1, 32], strides = [1, 1]} : vector<1x128xf32> to vector<1x32xf32>
    %53 = arith.mulf %50, %40 : vector<1x32xf32>
    %54 = arith.mulf %49, %51 : vector<1x32xf32>
    %55 = arith.addf %53, %54 : vector<1x32xf32>
    %56 = math.tanh %55 : vector<1x32xf32>
    %57 = arith.mulf %52, %56 : vector<1x32xf32>
    %58 = vector.extract_strided_slice %7 {offsets = [3, 0], sizes = [1, 128], strides = [1, 1]} : vector<8x128xf32> to vector<1x128xf32>
    %cst_15 = arith.constant dense<0.000000e+00> : vector<1x128xf32>
    %59 = tpu.matmul %57, %8, %cst_15 {dimension_numbers = #tpu.dot_dimension_numbers<[1], [0], [0], [1], [0, 0, 1, 1], [], []>} : vector<1x32xf32>, vector<32x128xf32>, vector<1x128xf32> -> vector<1x128xf32>
    %60 = arith.addf %58, %59 : vector<1x128xf32>
    %61 = math.tanh %60 : vector<1x128xf32>
    %62 = arith.mulf %61, %9 : vector<1x128xf32>
    %63 = arith.addf %62, %10 : vector<1x128xf32>
    %64 = vector.extract_strided_slice %63 {offsets = [0, 0], sizes = [1, 32], strides = [1, 1]} : vector<1x128xf32> to vector<1x32xf32>
    %65 = vector.extract_strided_slice %63 {offsets = [0, 32], sizes = [1, 32], strides = [1, 1]} : vector<1x128xf32> to vector<1x32xf32>
    %66 = vector.extract_strided_slice %63 {offsets = [0, 64], sizes = [1, 32], strides = [1, 1]} : vector<1x128xf32> to vector<1x32xf32>
    %67 = vector.extract_strided_slice %63 {offsets = [0, 96], sizes = [1, 32], strides = [1, 1]} : vector<1x128xf32> to vector<1x32xf32>
    %68 = arith.mulf %65, %55 : vector<1x32xf32>
    %69 = arith.mulf %64, %66 : vector<1x32xf32>
    %70 = arith.addf %68, %69 : vector<1x32xf32>
    %71 = math.tanh %70 : vector<1x32xf32>
    %72 = arith.mulf %67, %71 : vector<1x32xf32>
    %73 = vector.extract_strided_slice %7 {offsets = [4, 0], sizes = [1, 128], strides = [1, 1]} : vector<8x128xf32> to vector<1x128xf32>
    %cst_16 = arith.constant dense<0.000000e+00> : vector<1x128xf32>
    %74 = tpu.matmul %72, %8, %cst_16 {dimension_numbers = #tpu.dot_dimension_numbers<[1], [0], [0], [1], [0, 0, 1, 1], [], []>} : vector<1x32xf32>, vector<32x128xf32>, vector<1x128xf32> -> vector<1x128xf32>
    %75 = arith.addf %73, %74 : vector<1x128xf32>
    %76 = math.tanh %75 : vector<1x128xf32>
    %77 = arith.mulf %76, %9 : vector<1x128xf32>
    %78 = arith.addf %77, %10 : vector<1x128xf32>
    %79 = vector.extract_strided_slice %78 {offsets = [0, 0], sizes = [1, 32], strides = [1, 1]} : vector<1x128xf32> to vector<1x32xf32>
    %80 = vector.extract_strided_slice %78 {offsets = [0, 32], sizes = [1, 32], strides = [1, 1]} : vector<1x128xf32> to vector<1x32xf32>
    %81 = vector.extract_strided_slice %78 {offsets = [0, 64], sizes = [1, 32], strides = [1, 1]} : vector<1x128xf32> to vector<1x32xf32>
    %82 = vector.extract_strided_slice %78 {offsets = [0, 96], sizes = [1, 32], strides = [1, 1]} : vector<1x128xf32> to vector<1x32xf32>
    %83 = arith.mulf %80, %70 : vector<1x32xf32>
    %84 = arith.mulf %79, %81 : vector<1x32xf32>
    %85 = arith.addf %83, %84 : vector<1x32xf32>
    %86 = math.tanh %85 : vector<1x32xf32>
    %87 = arith.mulf %82, %86 : vector<1x32xf32>
    %88 = vector.extract_strided_slice %7 {offsets = [5, 0], sizes = [1, 128], strides = [1, 1]} : vector<8x128xf32> to vector<1x128xf32>
    %cst_17 = arith.constant dense<0.000000e+00> : vector<1x128xf32>
    %89 = tpu.matmul %87, %8, %cst_17 {dimension_numbers = #tpu.dot_dimension_numbers<[1], [0], [0], [1], [0, 0, 1, 1], [], []>} : vector<1x32xf32>, vector<32x128xf32>, vector<1x128xf32> -> vector<1x128xf32>
    %90 = arith.addf %88, %89 : vector<1x128xf32>
    %91 = math.tanh %90 : vector<1x128xf32>
    %92 = arith.mulf %91, %9 : vector<1x128xf32>
    %93 = arith.addf %92, %10 : vector<1x128xf32>
    %94 = vector.extract_strided_slice %93 {offsets = [0, 0], sizes = [1, 32], strides = [1, 1]} : vector<1x128xf32> to vector<1x32xf32>
    %95 = vector.extract_strided_slice %93 {offsets = [0, 32], sizes = [1, 32], strides = [1, 1]} : vector<1x128xf32> to vector<1x32xf32>
    %96 = vector.extract_strided_slice %93 {offsets = [0, 64], sizes = [1, 32], strides = [1, 1]} : vector<1x128xf32> to vector<1x32xf32>
    %97 = vector.extract_strided_slice %93 {offsets = [0, 96], sizes = [1, 32], strides = [1, 1]} : vector<1x128xf32> to vector<1x32xf32>
    %98 = arith.mulf %95, %85 : vector<1x32xf32>
    %99 = arith.mulf %94, %96 : vector<1x32xf32>
    %100 = arith.addf %98, %99 : vector<1x32xf32>
    %101 = math.tanh %100 : vector<1x32xf32>
    %102 = arith.mulf %97, %101 : vector<1x32xf32>
    %103 = vector.extract_strided_slice %7 {offsets = [6, 0], sizes = [1, 128], strides = [1, 1]} : vector<8x128xf32> to vector<1x128xf32>
    %cst_18 = arith.constant dense<0.000000e+00> : vector<1x128xf32>
    %104 = tpu.matmul %102, %8, %cst_18 {dimension_numbers = #tpu.dot_dimension_numbers<[1], [0], [0], [1], [0, 0, 1, 1], [], []>} : vector<1x32xf32>, vector<32x128xf32>, vector<1x128xf32> -> vector<1x128xf32>
    %105 = arith.addf %103, %104 : vector<1x128xf32>
    %106 = math.tanh %105 : vector<1x128xf32>
    %107 = arith.mulf %106, %9 : vector<1x128xf32>
    %108 = arith.addf %107, %10 : vector<1x128xf32>
    %109 = vector.extract_strided_slice %108 {offsets = [0, 0], sizes = [1, 32], strides = [1, 1]} : vector<1x128xf32> to vector<1x32xf32>
    %110 = vector.extract_strided_slice %108 {offsets = [0, 32], sizes = [1, 32], strides = [1, 1]} : vector<1x128xf32> to vector<1x32xf32>
    %111 = vector.extract_strided_slice %108 {offsets = [0, 64], sizes = [1, 32], strides = [1, 1]} : vector<1x128xf32> to vector<1x32xf32>
    %112 = vector.extract_strided_slice %108 {offsets = [0, 96], sizes = [1, 32], strides = [1, 1]} : vector<1x128xf32> to vector<1x32xf32>
    %113 = arith.mulf %110, %100 : vector<1x32xf32>
    %114 = arith.mulf %109, %111 : vector<1x32xf32>
    %115 = arith.addf %113, %114 : vector<1x32xf32>
    %116 = math.tanh %115 : vector<1x32xf32>
    %117 = arith.mulf %112, %116 : vector<1x32xf32>
    %118 = vector.extract_strided_slice %7 {offsets = [7, 0], sizes = [1, 128], strides = [1, 1]} : vector<8x128xf32> to vector<1x128xf32>
    %cst_19 = arith.constant dense<0.000000e+00> : vector<1x128xf32>
    %119 = tpu.matmul %117, %8, %cst_19 {dimension_numbers = #tpu.dot_dimension_numbers<[1], [0], [0], [1], [0, 0, 1, 1], [], []>} : vector<1x32xf32>, vector<32x128xf32>, vector<1x128xf32> -> vector<1x128xf32>
    %120 = arith.addf %118, %119 : vector<1x128xf32>
    %121 = math.tanh %120 : vector<1x128xf32>
    %122 = arith.mulf %121, %9 : vector<1x128xf32>
    %123 = arith.addf %122, %10 : vector<1x128xf32>
    %124 = vector.extract_strided_slice %123 {offsets = [0, 0], sizes = [1, 32], strides = [1, 1]} : vector<1x128xf32> to vector<1x32xf32>
    %125 = vector.extract_strided_slice %123 {offsets = [0, 32], sizes = [1, 32], strides = [1, 1]} : vector<1x128xf32> to vector<1x32xf32>
    %126 = vector.extract_strided_slice %123 {offsets = [0, 64], sizes = [1, 32], strides = [1, 1]} : vector<1x128xf32> to vector<1x32xf32>
    %127 = vector.extract_strided_slice %123 {offsets = [0, 96], sizes = [1, 32], strides = [1, 1]} : vector<1x128xf32> to vector<1x32xf32>
    %128 = arith.mulf %125, %115 : vector<1x32xf32>
    %129 = arith.mulf %124, %126 : vector<1x32xf32>
    %130 = arith.addf %128, %129 : vector<1x32xf32>
    %131 = math.tanh %130 : vector<1x32xf32>
    %132 = arith.mulf %127, %131 : vector<1x32xf32>
    %c0_20 = arith.constant 0 : index
    %c0_21 = arith.constant 0 : index
    %133 = vector.load %arg6[%c0_20, %c0_21] : memref<1x32xf32, #tpu.memory_space<vmem>>, vector<1x32xf32>
    %134 = arith.mulf %132, %133 : vector<1x32xf32>
    %cst_22 = arith.constant dense<0.000000e+00> : vector<1xf32>
    %135 = vector.multi_reduction <add>, %134, %cst_22 [1] : vector<1x32xf32> to vector<1xf32>
    %136 = vector.shape_cast %135 : vector<1xf32> to vector<1x1xf32>
    %c0_23 = arith.constant 0 : index
    %c0_24 = arith.constant 0 : index
    %137 = vector.load %arg7[%c0_23, %c0_24] : memref<1x1xf32, #tpu.memory_space<vmem>>, vector<1x1xf32>
    %138 = arith.addf %136, %137 : vector<1x1xf32>
    %c0_25 = arith.constant 0 : index
    %c0_26 = arith.constant 0 : index
    %139 = vector.load %arg8[%c0_25, %c0_26] : memref<1x1xf32, #tpu.memory_space<vmem>>, vector<1x1xf32>
    tpu.vector_store %arg8[%c0_25, %c0_26], %138 {strides = array<i32>} : memref<1x1xf32, #tpu.memory_space<vmem>>, vector<1x1xf32>,
    return
  }
}

</mosaic_0001>

<llo_original>
// kernel: lstm_forward_packed.1
$region0: #{lstm_forward_packed.1}
  #allocation0 [shape = 'u32[]', space=smem, size = 0x4, offset = 0x4, fixed_abs, tag = 'smem constant byte address 0x4 - core index']
  #allocation1 [shape = 'u32[144,128]{1,0:T(1,128)}', space=vmem, size = 0x12000, scoped, tag = 'internal scratch']
  #allocation2 [shape = 'f32[1,1]{1,0:T(1,128)S(1)}', space=vmem, size = 0x200, scoped, tag = 'scoped memory for lstm_forward_packed.1']
  %s0 = inlined_call_operand.vmem [shape: f32[8,1], index: 0, kind: input, shape index: {}]
  %s1 = inlined_call_operand.vmem [shape: f32[1,128], index: 1, kind: input, shape index: {}]
  %s2 = inlined_call_operand.hbm [shape: f32[32,128], index: 2, kind: input, shape index: {}]
  %s3 = inlined_call_operand.vmem [shape: f32[1,128], index: 3, kind: input, shape index: {}]
  %s4 = inlined_call_operand.vmem [shape: f32[1,128], index: 4, kind: input, shape index: {}]
  %s5 = inlined_call_operand.vmem [shape: f32[1,128], index: 5, kind: input, shape index: {}]
  %s6 = inlined_call_operand.vmem [shape: f32[1,32], index: 6, kind: input, shape index: {}]
  %s7 = inlined_call_operand.<no memory space> [shape: f32[1,1], index: 7, kind: input, shape index: {}]
  %s8 = inlined_call_operand.hbm [shape: f32[1,1], index: 8, kind: output, shape index: {}]
  %s9 = sld [smem:[#allocation0]]
  $region46: #{lstm_forward_packed.1} parent=0
    _
  %s11 = ssub.s32 1, %s9
  %s12 = scalar_select 0, %s11, %s9
  %v13 = vstv %s7
  %14 = vst [vmem:[#allocation2] sm:$0x1] %v13
  $region1: #{lstm_forward_packed.1} parent=0
    #allocation3 [shape = 'u8[16384]{0}', space=vmem, size = 0x4000, scoped, tag = 'input window, operand 2, single buffered']
    #allocation4 [shape = 's32[1]{0}', space=sflag, size = 0x4, scoped, tag = 'scoped memory for lstm_forward_packed.1']
    #allocation5 [shape = 's32[1]{0}', space=sflag, size = 0x4, scoped, tag = 'scoped memory for lstm_forward_packed.1']
    #allocation6 [shape = 'u8[512]{0}', space=vmem, size = 0x400, scoped, tag = 'output window, operand 0, single buffered']
    %15 = vsyncpa [#allocation4], 0
    %16 = vsyncpa [#allocation5], 0
    // Predicated region
    $region2: #{lstm_forward_packed.1} parent=1 // pred_check
      _
    $region3: #{lstm_forward_packed.1} parent=1 // pred_check_branch
      %18 = sbr.rel (0) target = $region5
    $region4: #{lstm_forward_packed.1} parent=1 // pred_region
      _
    $region5: #{lstm_forward_packed.1} parent=1 // pred_fallthru
      _
    // Predicated region
    $region6: #{lstm_forward_packed.1} parent=1 // pred_check
      _
    $region7: #{lstm_forward_packed.1} parent=1 // pred_check_branch
      %20 = sbr.rel (0) target = $region9
    $region8: #{lstm_forward_packed.1} parent=1 // pred_region
      _
    $region9: #{lstm_forward_packed.1} parent=1 // pred_fallthru
      _
    // Predicated region
    $region10: #{lstm_forward_packed.1} parent=1 // pred_check
      _
    $region11: #{lstm_forward_packed.1} parent=1 // pred_check_branch
      %22 = sbr.rel (0) target = $region13
    $region12: #{lstm_forward_packed.1} parent=1 // pred_region
      %s24 = ssub.s32 512, 512
      %25 = vsyncadd [#allocation4], %s24
      %s26 = sshll.u32 [#allocation3], 4
      %s27 = int_to_ptr.vmem [resolvable:$true] %s26
      %32 = dma.hbm_to_vmem [thread:$0]  %s2, 512, %s27, [#allocation4], 128, 128, 8
    $region13: #{lstm_forward_packed.1} parent=1 // pred_fallthru
      _
    // Predicated region
    $region14: #{lstm_forward_packed.1} parent=1 // pred_check
      _
    $region15: #{lstm_forward_packed.1} parent=1 // pred_check_branch
      %34 = sbr.rel (0) target = $region17
    $region16: #{lstm_forward_packed.1} parent=1 // pred_region
      _
    $region17: #{lstm_forward_packed.1} parent=1 // pred_fallthru
      _
    // Predicated region
    $region18: #{lstm_forward_packed.1} parent=1 // pred_check
      _
    $region19: #{lstm_forward_packed.1} parent=1 // pred_check_branch
      %36 = sbr.rel (0) target = $region21
    $region20: #{lstm_forward_packed.1} parent=1 // pred_region
      _
    $region21: #{lstm_forward_packed.1} parent=1 // pred_fallthru
      _
    // Predicated region
    $region22: #{lstm_forward_packed.1} parent=1 // pred_check
      _
    $region23: #{lstm_forward_packed.1} parent=1 // pred_check_branch
      %38 = sbr.rel (0) target = $region25
    $region24: #{lstm_forward_packed.1} parent=1 // pred_region
      _
    $region25: #{lstm_forward_packed.1} parent=1 // pred_fallthru
      _
    // Predicated region
    $region26: #{lstm_forward_packed.1} parent=1 // pred_check
      _
    $region27: #{lstm_forward_packed.1} parent=1 // pred_check_branch
      %40 = sbr.rel (0) target = $region29
    $region28: #{lstm_forward_packed.1} parent=1 // pred_region
      _
    $region29: #{lstm_forward_packed.1} parent=1 // pred_fallthru
      _
    // Predicated region
    $region30: #{lstm_forward_packed.1} parent=1 // pred_check
      _
    $region31: #{lstm_forward_packed.1} parent=1 // pred_check_branch
      %42 = sbr.rel (0) target = $region33
    $region32: #{lstm_forward_packed.1} parent=1 // pred_region
      _
    $region33: #{lstm_forward_packed.1} parent=1 // pred_fallthru
      _
    // Predicated region
    $region34: #{lstm_forward_packed.1} parent=1 // pred_check
      _
    $region35: #{lstm_forward_packed.1} parent=1 // pred_check_branch
      %44 = sbr.rel (0) target = $region37
    $region36: #{lstm_forward_packed.1} parent=1 // pred_region
      %45 = dma.done [#allocation4], 512
    $region37: #{lstm_forward_packed.1} parent=1 // pred_fallthru
      _
    %v46 = vld [vmem:[%s0] sm:$0xff]
    %v47 = vld [vmem:[%s1] sm:$0x1]
    %49 = vset.pattern.permute.xlu0 0
    %50 = vperm.xlu0 %49, %v46
    %v51 = vpop.permute.xlu0 %50
    %v54 = vlaneseq
    %v55 = vshrl.u32 %v54, 7
    %v56 = vsub.s32 0, %v55
    %v57 = vrot.slane %v47, %v56
    %v59 = vmul.f32 %v51, %v57
    %v60 = vld [vmem:[%s3] sm:$0x1]
    %v62 = vlaneseq
    %v63 = vshrl.u32 %v62, 7
    %v64 = vsub.s32 0, %v63
    %v65 = vrot.slane %v60, %v64
    %v67 = vadd.f32 %v59, %v65
    %v68 = vld [vmem:[#allocation3] sm:$0xff]
    %v69 = vld [vmem:[#allocation3 + $0x8] sm:$0xff]
    %v70 = vld [vmem:[#allocation3 + $0x10] sm:$0xff]
    %v71 = vld [vmem:[#allocation3 + $0x18] sm:$0xff]
    %v72 = vld [vmem:[%s4] sm:$0x1]
    %v73 = vld [vmem:[%s5] sm:$0x1]
    %vm74 = vcmask 261120
    %v76 = vsel %vm74, 0.0, 0
    %78 = vmatprep.subr.mxu0 0.0
    %79 = vmatpush1.msra.mxu0 %v68
    %80 = vmatprep.subr.mxu0 0.0
    %81 = vmatpush1.msra.mxu0 %v69
    %82 = vmatprep.subr.mxu0 0.0
    %83 = vmatpush1.msra.mxu0 %v70
    %84 = vmatprep.subr.mxu0 0.0
    %85 = vmatpush1.msra.mxu0 %v71
    %86 = vmatprep.subr.mxu0 0.0
    %87 = vmatpush1.msra.mxu0 0.0
    %88 = vmatprep.subr.mxu0 0.0
    %89 = vmatpush1.msra.mxu0 0.0
    %90 = vmatprep.subr.mxu0 0.0
    %91 = vmatpush1.msra.mxu0 0.0
    %92 = vmatprep.subr.mxu0 0.0
    %93 = vmatpush1.msra.mxu0 0.0
    %94 = vmatprep.subr.mxu0 0.0
    %95 = vmatpush1.msra.mxu0 0.0
    %96 = vmatprep.subr.mxu0 0.0
    %97 = vmatpush1.msra.mxu0 0.0
    %98 = vmatprep.subr.mxu0 0.0
    %99 = vmatpush1.msra.mxu0 0.0
    %100 = vmatprep.subr.mxu0 0.0
    %101 = vmatpush1.msra.mxu0 0.0
    %102 = vmatprep.subr.mxu0 0.0
    %103 = vmatpush1.msra.mxu0 0.0
    %104 = vmatprep.subr.mxu0 0.0
    %105 = vmatpush1.msra.mxu0 0.0
    %106 = vmatprep.subr.mxu0 0.0
    %107 = vmatpush1.msra.mxu0 0.0
    %108 = vmatprep.subr.mxu0 0.0
    %109 = vmatpush1.msra.mxu0 0.0
    %110 = vmatprep.subr.mxu0 0.0
    %111 = vmatpush1.msra.mxu0 0.0
    %112 = vmatprep.subr.mxu0 0.0
    %113 = vmatpush1.msra.mxu0 0.0
    %114 = vmatprep.subr.mxu0 0.0
    %115 = vmatpush1.msra.mxu0 0.0
    %116 = vmatprep.subr.mxu0 0.0
    %117 = vmatpush1.msra.mxu0 0.0
    %118 = vmatprep.subr.mxu0 0.0
    %119 = vmatpush1.msra.mxu0 0.0
    %120 = vmatprep.subr.mxu0 0.0
    %121 = vmatpush1.msra.mxu0 0.0
    %122 = vmatprep.subr.mxu0 0.0
    %123 = vmatpush1.msra.mxu0 0.0
    %124 = vmatprep.subr.mxu0 0.0
    %125 = vmatpush1.msra.mxu0 0.0
    %126 = vmatprep.subr.mxu0 0.0
    %127 = vmatpush1.msra.mxu0 0.0
    %128 = vmatprep.subr.mxu0 0.0
    %129 = vmatpush1.msra.mxu0 0.0
    %130 = vmatprep.subr.mxu0 0.0
    %131 = vmatpush1.msra.mxu0 0.0
    %132 = vmatprep.subr.mxu0 0.0
    %133 = vmatpush1.msra.mxu0 0.0
    %134 = vmatprep.subr.mxu0 0.0
    %135 = vmatpush1.msra.mxu0 0.0
    %136 = vmatprep.subr.mxu0 0.0
    %137 = vmatpush1.msra.mxu0 0.0
    %138 = vmatprep.subr.mxu0 0.0
    %139 = vmatpush1.msra.mxu0 0.0
    %140 = vmatprep.subr.mxu0 0.0
    %141 = vmatpush1.msra.mxu0 0.0
    %142 = vmatprep.mubr.f32.mxu0 0.0
    %143 = vmatmul.mubr.f32.gmra.mrb[0].mxu0 %v76
    %v144 = vpop.f32.mrb[0].mxu0
    %v145 = vadd.f32 0.0, %v144
    %v146 = vpop.f32.mrb[0].mxu0
    %147 = vdwg.mxu0
    %v148 = vadd.f32 %v67, %v145
    %v149 = vtanh.pop %v148
    %v150 = vmul.f32 %v149, %v72
    %v151 = vadd.f32 %v150, %v73
    %v152 = vmul.f32 %v151, 0.0
    %154 = vrot.lane.b32.xlu0 %v151, 64
    %v155 = vpop.permute.xlu0 %154
    %v157 = vmul.f32 %v151, %v155
    %159 = vrot.lane.b32.xlu0 %v157, 32
    %v160 = vpop.permute.xlu0 %159
    %v162 = vadd.f32 %v152, %v160
    %v163 = vtanh.pop %v162
    %165 = vrot.lane.b32.xlu0 %v163, 64
    %v166 = vpop.permute.xlu0 %165
    %v168 = vmul.f32 %v151, %v166
    %170 = vrot.lane.b32.xlu0 %v168, 32
    %v171 = vpop.permute.xlu0 %170
    %v172 = vsel %vm74, %v171, 0
    %174 = vmatprep.subr.mxu0 0.0
    %175 = vmatpush1.msra.mxu0 %v68
    %176 = vmatprep.subr.mxu0 0.0
    %177 = vmatpush1.msra.mxu0 %v69
    %178 = vmatprep.subr.mxu0 0.0
    %179 = vmatpush1.msra.mxu0 %v70
    %180 = vmatprep.subr.mxu0 0.0
    %181 = vmatpush1.msra.mxu0 %v71
    %182 = vmatprep.subr.mxu0 0.0
    %183 = vmatpush1.msra.mxu0 0.0
    %184 = vmatprep.subr.mxu0 0.0
    %185 = vmatpush1.msra.mxu0 0.0
    %186 = vmatprep.subr.mxu0 0.0
    %187 = vmatpush1.msra.mxu0 0.0
    %188 = vmatprep.subr.mxu0 0.0
    %189 = vmatpush1.msra.mxu0 0.0
    %190 = vmatprep.subr.mxu0 0.0
    %191 = vmatpush1.msra.mxu0 0.0
    %192 = vmatprep.subr.mxu0 0.0
    %193 = vmatpush1.msra.mxu0 0.0
    %194 = vmatprep.subr.mxu0 0.0
    %195 = vmatpush1.msra.mxu0 0.0
    %196 = vmatprep.subr.mxu0 0.0
    %197 = vmatpush1.msra.mxu0 0.0
    %198 = vmatprep.subr.mxu0 0.0
    %199 = vmatpush1.msra.mxu0 0.0
    %200 = vmatprep.subr.mxu0 0.0
    %201 = vmatpush1.msra.mxu0 0.0
    %202 = vmatprep.subr.mxu0 0.0
    %203 = vmatpush1.msra.mxu0 0.0
    %204 = vmatprep.subr.mxu0 0.0
    %205 = vmatpush1.msra.mxu0 0.0
    %206 = vmatprep.subr.mxu0 0.0
    %207 = vmatpush1.msra.mxu0 0.0
    %208 = vmatprep.subr.mxu0 0.0
    %209 = vmatpush1.msra.mxu0 0.0
    %210 = vmatprep.subr.mxu0 0.0
    %211 = vmatpush1.msra.mxu0 0.0
    %212 = vmatprep.subr.mxu0 0.0
    %213 = vmatpush1.msra.mxu0 0.0
    %214 = vmatprep.subr.mxu0 0.0
    %215 = vmatpush1.msra.mxu0 0.0
    %216 = vmatprep.subr.mxu0 0.0
    %217 = vmatpush1.msra.mxu0 0.0
    %218 = vmatprep.subr.mxu0 0.0
    %219 = vmatpush1.msra.mxu0 0.0
    %220 = vmatprep.subr.mxu0 0.0
    %221 = vmatpush1.msra.mxu0 0.0
    %222 = vmatprep.subr.mxu0 0.0
    %223 = vmatpush1.msra.mxu0 0.0
    %224 = vmatprep.subr.mxu0 0.0
    %225 = vmatpush1.msra.mxu0 0.0
    %226 = vmatprep.subr.mxu0 0.0
    %227 = vmatpush1.msra.mxu0 0.0
    %228 = vmatprep.subr.mxu0 0.0
    %229 = vmatpush1.msra.mxu0 0.0
    %230 = vmatprep.subr.mxu0 0.0
    %231 = vmatpush1.msra.mxu0 0.0
    %232 = vmatprep.subr.mxu0 0.0
    %233 = vmatpush1.msra.mxu0 0.0
    %234 = vmatprep.subr.mxu0 0.0
    %235 = vmatpush1.msra.mxu0 0.0
    %236 = vmatprep.subr.mxu0 0.0
    %237 = vmatpush1.msra.mxu0 0.0
    %238 = vmatprep.mubr.f32.mxu0 0.0
    %239 = vmatmul.mubr.f32.gmra.mrb[0].mxu0 %v172
    %v240 = vpop.f32.mrb[0].mxu0
    %v241 = vadd.f32 0.0, %v240
    %v242 = vpop.f32.mrb[0].mxu0
    %243 = vdwg.mxu0
    %v245 = vrot.slane %v241, 7
    %v247 = vadd.f32 %v67, %v245
    %v248 = vtanh.pop %v247
    %v250 = vlaneseq
    %v251 = vshrl.u32 %v250, 7
    %v252 = vsub.s32 0, %v251
    %v253 = vrot.slane %v72, %v252
    %v255 = vmul.f32 %v248, %v253
    %v257 = vlaneseq
    %v258 = vshrl.u32 %v257, 7
    %v259 = vsub.s32 0, %v258
    %v260 = vrot.slane %v73, %v259
    %v262 = vadd.f32 %v255, %v260
    %v264 = vrot.slane %v162, 7
    %v266 = vmul.f32 %v262, %v264
    %268 = vrot.lane.b32.xlu0 %v262, 64
    %v269 = vpop.permute.xlu0 %268
    %v271 = vmul.f32 %v262, %v269
    %273 = vrot.lane.b32.xlu0 %v271, 32
    %v274 = vpop.permute.xlu0 %273
    %v276 = vadd.f32 %v266, %v274
    %v277 = vtanh.pop %v276
    %279 = vrot.lane.b32.xlu0 %v277, 64
    %v280 = vpop.permute.xlu0 %279
    %v282 = vmul.f32 %v262, %v280
    %v284 = vrot.slane %v282, 1
    %285 = vrot.lane.b32.xlu0 %v284, 32
    %v286 = vpop.permute.xlu0 %285
    %v287 = vsel %vm74, %v286, 0
    %289 = vmatprep.subr.mxu0 0.0
    %290 = vmatpush1.msra.mxu0 %v68
    %291 = vmatprep.subr.mxu0 0.0
    %292 = vmatpush1.msra.mxu0 %v69
    %293 = vmatprep.subr.mxu0 0.0
    %294 = vmatpush1.msra.mxu0 %v70
    %295 = vmatprep.subr.mxu0 0.0
    %296 = vmatpush1.msra.mxu0 %v71
    %297 = vmatprep.subr.mxu0 0.0
    %298 = vmatpush1.msra.mxu0 0.0
    %299 = vmatprep.subr.mxu0 0.0
    %300 = vmatpush1.msra.mxu0 0.0
    %301 = vmatprep.subr.mxu0 0.0
    %302 = vmatpush1.msra.mxu0 0.0
    %303 = vmatprep.subr.mxu0 0.0
    %304 = vmatpush1.msra.mxu0 0.0
    %305 = vmatprep.subr.mxu0 0.0
    %306 = vmatpush1.msra.mxu0 0.0
    %307 = vmatprep.subr.mxu0 0.0
    %308 = vmatpush1.msra.mxu0 0.0
    %309 = vmatprep.subr.mxu0 0.0
    %310 = vmatpush1.msra.mxu0 0.0
    %311 = vmatprep.subr.mxu0 0.0
    %312 = vmatpush1.msra.mxu0 0.0
    %313 = vmatprep.subr.mxu0 0.0
    %314 = vmatpush1.msra.mxu0 0.0
    %315 = vmatprep.subr.mxu0 0.0
    %316 = vmatpush1.msra.mxu0 0.0
    %317 = vmatprep.subr.mxu0 0.0
    %318 = vmatpush1.msra.mxu0 0.0
    %319 = vmatprep.subr.mxu0 0.0
    %320 = vmatpush1.msra.mxu0 0.0
    %321 = vmatprep.subr.mxu0 0.0
    %322 = vmatpush1.msra.mxu0 0.0
    %323 = vmatprep.subr.mxu0 0.0
    %324 = vmatpush1.msra.mxu0 0.0
    %325 = vmatprep.subr.mxu0 0.0
    %326 = vmatpush1.msra.mxu0 0.0
    %327 = vmatprep.subr.mxu0 0.0
    %328 = vmatpush1.msra.mxu0 0.0
    %329 = vmatprep.subr.mxu0 0.0
    %330 = vmatpush1.msra.mxu0 0.0
    %331 = vmatprep.subr.mxu0 0.0
    %332 = vmatpush1.msra.mxu0 0.0
    %333 = vmatprep.subr.mxu0 0.0
    %334 = vmatpush1.msra.mxu0 0.0
    %335 = vmatprep.subr.mxu0 0.0
    %336 = vmatpush1.msra.mxu0 0.0
    %337 = vmatprep.subr.mxu0 0.0
    %338 = vmatpush1.msra.mxu0 0.0
    %339 = vmatprep.subr.mxu0 0.0
    %340 = vmatpush1.msra.mxu0 0.0
    %341 = vmatprep.subr.mxu0 0.0
    %342 = vmatpush1.msra.mxu0 0.0
    %343 = vmatprep.subr.mxu0 0.0
    %344 = vmatpush1.msra.mxu0 0.0
    %345 = vmatprep.subr.mxu0 0.0
    %346 = vmatpush1.msra.mxu0 0.0
    %347 = vmatprep.subr.mxu0 0.0
    %348 = vmatpush1.msra.mxu0 0.0
    %349 = vmatprep.subr.mxu0 0.0
    %350 = vmatpush1.msra.mxu0 0.0
    %351 = vmatprep.subr.mxu0 0.0
    %352 = vmatpush1.msra.mxu0 0.0
    %353 = vmatprep.mubr.f32.mxu0 0.0
    %354 = vmatmul.mubr.f32.gmra.mrb[0].mxu0 %v287
    %v355 = vpop.f32.mrb[0].mxu0
    %v356 = vadd.f32 0.0, %v355
    %v357 = vpop.f32.mrb[0].mxu0
    %358 = vdwg.mxu0
    %v360 = vrot.slane %v356, 6
    %v362 = vadd.f32 %v67, %v360
    %v363 = vtanh.pop %v362
    %v364 = vmul.f32 %v363, %v253
    %v365 = vadd.f32 %v364, %v260
    %v367 = vrot.slane %v276, 7
    %v369 = vmul.f32 %v365, %v367
    %371 = vrot.lane.b32.xlu0 %v365, 64
    %v372 = vpop.permute.xlu0 %371
    %v374 = vmul.f32 %v365, %v372
    %376 = vrot.lane.b32.xlu0 %v374, 32
    %v377 = vpop.permute.xlu0 %376
    %v379 = vadd.f32 %v369, %v377
    %v380 = vtanh.pop %v379
    %382 = vrot.lane.b32.xlu0 %v380, 64
    %v383 = vpop.permute.xlu0 %382
    %v385 = vmul.f32 %v365, %v383
    %v387 = vrot.slane %v385, 2
    %388 = vrot.lane.b32.xlu0 %v387, 32
    %v389 = vpop.permute.xlu0 %388
    %v390 = vsel %vm74, %v389, 0
    %392 = vmatprep.subr.mxu0 0.0
    %393 = vmatpush1.msra.mxu0 %v68
    %394 = vmatprep.subr.mxu0 0.0
    %395 = vmatpush1.msra.mxu0 %v69
    %396 = vmatprep.subr.mxu0 0.0
    %397 = vmatpush1.msra.mxu0 %v70
    %398 = vmatprep.subr.mxu0 0.0
    %399 = vmatpush1.msra.mxu0 %v71
    %400 = vmatprep.subr.mxu0 0.0
    %401 = vmatpush1.msra.mxu0 0.0
    %402 = vmatprep.subr.mxu0 0.0
    %403 = vmatpush1.msra.mxu0 0.0
    %404 = vmatprep.subr.mxu0 0.0
    %405 = vmatpush1.msra.mxu0 0.0
    %406 = vmatprep.subr.mxu0 0.0
    %407 = vmatpush1.msra.mxu0 0.0
    %408 = vmatprep.subr.mxu0 0.0
    %409 = vmatpush1.msra.mxu0 0.0
    %410 = vmatprep.subr.mxu0 0.0
    %411 = vmatpush1.msra.mxu0 0.0
    %412 = vmatprep.subr.mxu0 0.0
    %413 = vmatpush1.msra.mxu0 0.0
    %414 = vmatprep.subr.mxu0 0.0
    %415 = vmatpush1.msra.mxu0 0.0
    %416 = vmatprep.subr.mxu0 0.0
    %417 = vmatpush1.msra.mxu0 0.0
    %418 = vmatprep.subr.mxu0 0.0
    %419 = vmatpush1.msra.mxu0 0.0
    %420 = vmatprep.subr.mxu0 0.0
    %421 = vmatpush1.msra.mxu0 0.0
    %422 = vmatprep.subr.mxu0 0.0
    %423 = vmatpush1.msra.mxu0 0.0
    %424 = vmatprep.subr.mxu0 0.0
    %425 = vmatpush1.msra.mxu0 0.0
    %426 = vmatprep.subr.mxu0 0.0
    %427 = vmatpush1.msra.mxu0 0.0
    %428 = vmatprep.subr.mxu0 0.0
    %429 = vmatpush1.msra.mxu0 0.0
    %430 = vmatprep.subr.mxu0 0.0
    %431 = vmatpush1.msra.mxu0 0.0
    %432 = vmatprep.subr.mxu0 0.0
    %433 = vmatpush1.msra.mxu0 0.0
    %434 = vmatprep.subr.mxu0 0.0
    %435 = vmatpush1.msra.mxu0 0.0
    %436 = vmatprep.subr.mxu0 0.0
    %437 = vmatpush1.msra.mxu0 0.0
    %438 = vmatprep.subr.mxu0 0.0
    %439 = vmatpush1.msra.mxu0 0.0
    %440 = vmatprep.subr.mxu0 0.0
    %441 = vmatpush1.msra.mxu0 0.0
    %442 = vmatprep.subr.mxu0 0.0
    %443 = vmatpush1.msra.mxu0 0.0
    %444 = vmatprep.subr.mxu0 0.0
    %445 = vmatpush1.msra.mxu0 0.0
    %446 = vmatprep.subr.mxu0 0.0
    %447 = vmatpush1.msra.mxu0 0.0
    %448 = vmatprep.subr.mxu0 0.0
    %449 = vmatpush1.msra.mxu0 0.0
    %450 = vmatprep.subr.mxu0 0.0
    %451 = vmatpush1.msra.mxu0 0.0
    %452 = vmatprep.subr.mxu0 0.0
    %453 = vmatpush1.msra.mxu0 0.0
    %454 = vmatprep.subr.mxu0 0.0
    %455 = vmatpush1.msra.mxu0 0.0
    %456 = vmatprep.mubr.f32.mxu0 0.0
    %457 = vmatmul.mubr.f32.gmra.mrb[0].mxu0 %v390
    %v458 = vpop.f32.mrb[0].mxu0
    %v459 = vadd.f32 0.0, %v458
    %v460 = vpop.f32.mrb[0].mxu0
    %461 = vdwg.mxu0
    %v463 = vrot.slane %v459, 5
    %v465 = vadd.f32 %v67, %v463
    %v466 = vtanh.pop %v465
    %v467 = vmul.f32 %v466, %v253
    %v468 = vadd.f32 %v467, %v260
    %v470 = vrot.slane %v379, 7
    %v472 = vmul.f32 %v468, %v470
    %474 = vrot.lane.b32.xlu0 %v468, 64
    %v475 = vpop.permute.xlu0 %474
    %v477 = vmul.f32 %v468, %v475
    %479 = vrot.lane.b32.xlu0 %v477, 32
    %v480 = vpop.permute.xlu0 %479
    %v482 = vadd.f32 %v472, %v480
    %v483 = vtanh.pop %v482
    %485 = vrot.lane.b32.xlu0 %v483, 64
    %v486 = vpop.permute.xlu0 %485
    %v488 = vmul.f32 %v468, %v486
    %v490 = vrot.slane %v488, 3
    %491 = vrot.lane.b32.xlu0 %v490, 32
    %v492 = vpop.permute.xlu0 %491
    %v493 = vsel %vm74, %v492, 0
    %495 = vmatprep.subr.mxu0 0.0
    %496 = vmatpush1.msra.mxu0 %v68
    %497 = vmatprep.subr.mxu0 0.0
    %498 = vmatpush1.msra.mxu0 %v69
    %499 = vmatprep.subr.mxu0 0.0
    %500 = vmatpush1.msra.mxu0 %v70
    %501 = vmatprep.subr.mxu0 0.0
    %502 = vmatpush1.msra.mxu0 %v71
    %503 = vmatprep.subr.mxu0 0.0
    %504 = vmatpush1.msra.mxu0 0.0
    %505 = vmatprep.subr.mxu0 0.0
    %506 = vmatpush1.msra.mxu0 0.0
    %507 = vmatprep.subr.mxu0 0.0
    %508 = vmatpush1.msra.mxu0 0.0
    %509 = vmatprep.subr.mxu0 0.0
    %510 = vmatpush1.msra.mxu0 0.0
    %511 = vmatprep.subr.mxu0 0.0
    %512 = vmatpush1.msra.mxu0 0.0
    %513 = vmatprep.subr.mxu0 0.0
    %514 = vmatpush1.msra.mxu0 0.0
    %515 = vmatprep.subr.mxu0 0.0
    %516 = vmatpush1.msra.mxu0 0.0
    %517 = vmatprep.subr.mxu0 0.0
    %518 = vmatpush1.msra.mxu0 0.0
    %519 = vmatprep.subr.mxu0 0.0
    %520 = vmatpush1.msra.mxu0 0.0
    %521 = vmatprep.subr.mxu0 0.0
    %522 = vmatpush1.msra.mxu0 0.0
    %523 = vmatprep.subr.mxu0 0.0
    %524 = vmatpush1.msra.mxu0 0.0
    %525 = vmatprep.subr.mxu0 0.0
    %526 = vmatpush1.msra.mxu0 0.0
    %527 = vmatprep.subr.mxu0 0.0
    %528 = vmatpush1.msra.mxu0 0.0
    %529 = vmatprep.subr.mxu0 0.0
    %530 = vmatpush1.msra.mxu0 0.0
    %531 = vmatprep.subr.mxu0 0.0
    %532 = vmatpush1.msra.mxu0 0.0
    %533 = vmatprep.subr.mxu0 0.0
    %534 = vmatpush1.msra.mxu0 0.0
    %535 = vmatprep.subr.mxu0 0.0
    %536 = vmatpush1.msra.mxu0 0.0
    %537 = vmatprep.subr.mxu0 0.0
    %538 = vmatpush1.msra.mxu0 0.0
    %539 = vmatprep.subr.mxu0 0.0
    %540 = vmatpush1.msra.mxu0 0.0
    %541 = vmatprep.subr.mxu0 0.0
    %542 = vmatpush1.msra.mxu0 0.0
    %543 = vmatprep.subr.mxu0 0.0
    %544 = vmatpush1.msra.mxu0 0.0
    %545 = vmatprep.subr.mxu0 0.0
    %546 = vmatpush1.msra.mxu0 0.0
    %547 = vmatprep.subr.mxu0 0.0
    %548 = vmatpush1.msra.mxu0 0.0
    %549 = vmatprep.subr.mxu0 0.0
    %550 = vmatpush1.msra.mxu0 0.0
    %551 = vmatprep.subr.mxu0 0.0
    %552 = vmatpush1.msra.mxu0 0.0
    %553 = vmatprep.subr.mxu0 0.0
    %554 = vmatpush1.msra.mxu0 0.0
    %555 = vmatprep.subr.mxu0 0.0
    %556 = vmatpush1.msra.mxu0 0.0
    %557 = vmatprep.subr.mxu0 0.0
    %558 = vmatpush1.msra.mxu0 0.0
    %559 = vmatprep.mubr.f32.mxu0 0.0
    %560 = vmatmul.mubr.f32.gmra.mrb[0].mxu0 %v493
    %v561 = vpop.f32.mrb[0].mxu0
    %v562 = vadd.f32 0.0, %v561
    %v563 = vpop.f32.mrb[0].mxu0
    %564 = vdwg.mxu0
    %v566 = vrot.slane %v562, 4
    %v568 = vadd.f32 %v67, %v566
    %v569 = vtanh.pop %v568
    %v570 = vmul.f32 %v569, %v253
    %v571 = vadd.f32 %v570, %v260
    %v573 = vrot.slane %v482, 7
    %v575 = vmul.f32 %v571, %v573
    %577 = vrot.lane.b32.xlu0 %v571, 64
    %v578 = vpop.permute.xlu0 %577
    %v580 = vmul.f32 %v571, %v578
    %582 = vrot.lane.b32.xlu0 %v580, 32
    %v583 = vpop.permute.xlu0 %582
    %v585 = vadd.f32 %v575, %v583
    %v586 = vtanh.pop %v585
    %588 = vrot.lane.b32.xlu0 %v586, 64
    %v589 = vpop.permute.xlu0 %588
    %v591 = vmul.f32 %v571, %v589
    %v593 = vrot.slane %v591, 4
    %594 = vrot.lane.b32.xlu0 %v593, 32
    %v595 = vpop.permute.xlu0 %594
    %v596 = vsel %vm74, %v595, 0
    %598 = vmatprep.subr.mxu0 0.0
    %599 = vmatpush1.msra.mxu0 %v68
    %600 = vmatprep.subr.mxu0 0.0
    %601 = vmatpush1.msra.mxu0 %v69
    %602 = vmatprep.subr.mxu0 0.0
    %603 = vmatpush1.msra.mxu0 %v70
    %604 = vmatprep.subr.mxu0 0.0
    %605 = vmatpush1.msra.mxu0 %v71
    %606 = vmatprep.subr.mxu0 0.0
    %607 = vmatpush1.msra.mxu0 0.0
    %608 = vmatprep.subr.mxu0 0.0
    %609 = vmatpush1.msra.mxu0 0.0
    %610 = vmatprep.subr.mxu0 0.0
    %611 = vmatpush1.msra.mxu0 0.0
    %612 = vmatprep.subr.mxu0 0.0
    %613 = vmatpush1.msra.mxu0 0.0
    %614 = vmatprep.subr.mxu0 0.0
    %615 = vmatpush1.msra.mxu0 0.0
    %616 = vmatprep.subr.mxu0 0.0
    %617 = vmatpush1.msra.mxu0 0.0
    %618 = vmatprep.subr.mxu0 0.0
    %619 = vmatpush1.msra.mxu0 0.0
    %620 = vmatprep.subr.mxu0 0.0
    %621 = vmatpush1.msra.mxu0 0.0
    %622 = vmatprep.subr.mxu0 0.0
    %623 = vmatpush1.msra.mxu0 0.0
    %624 = vmatprep.subr.mxu0 0.0
    %625 = vmatpush1.msra.mxu0 0.0
    %626 = vmatprep.subr.mxu0 0.0
    %627 = vmatpush1.msra.mxu0 0.0
    %628 = vmatprep.subr.mxu0 0.0
    %629 = vmatpush1.msra.mxu0 0.0
    %630 = vmatprep.subr.mxu0 0.0
    %631 = vmatpush1.msra.mxu0 0.0
    %632 = vmatprep.subr.mxu0 0.0
    %633 = vmatpush1.msra.mxu0 0.0
    %634 = vmatprep.subr.mxu0 0.0
    %635 = vmatpush1.msra.mxu0 0.0
    %636 = vmatprep.subr.mxu0 0.0
    %637 = vmatpush1.msra.mxu0 0.0
    %638 = vmatprep.subr.mxu0 0.0
    %639 = vmatpush1.msra.mxu0 0.0
    %640 = vmatprep.subr.mxu0 0.0
    %641 = vmatpush1.msra.mxu0 0.0
    %642 = vmatprep.subr.mxu0 0.0
    %643 = vmatpush1.msra.mxu0 0.0
    %644 = vmatprep.subr.mxu0 0.0
    %645 = vmatpush1.msra.mxu0 0.0
    %646 = vmatprep.subr.mxu0 0.0
    %647 = vmatpush1.msra.mxu0 0.0
    %648 = vmatprep.subr.mxu0 0.0
    %649 = vmatpush1.msra.mxu0 0.0
    %650 = vmatprep.subr.mxu0 0.0
    %651 = vmatpush1.msra.mxu0 0.0
    %652 = vmatprep.subr.mxu0 0.0
    %653 = vmatpush1.msra.mxu0 0.0
    %654 = vmatprep.subr.mxu0 0.0
    %655 = vmatpush1.msra.mxu0 0.0
    %656 = vmatprep.subr.mxu0 0.0
    %657 = vmatpush1.msra.mxu0 0.0
    %658 = vmatprep.subr.mxu0 0.0
    %659 = vmatpush1.msra.mxu0 0.0
    %660 = vmatprep.subr.mxu0 0.0
    %661 = vmatpush1.msra.mxu0 0.0
    %662 = vmatprep.mubr.f32.mxu0 0.0
    %663 = vmatmul.mubr.f32.gmra.mrb[0].mxu0 %v596
    %v664 = vpop.f32.mrb[0].mxu0
    %v665 = vadd.f32 0.0, %v664
    %v666 = vpop.f32.mrb[0].mxu0
    %667 = vdwg.mxu0
    %v669 = vrot.slane %v665, 3
    %v671 = vadd.f32 %v67, %v669
    %v672 = vtanh.pop %v671
    %v673 = vmul.f32 %v672, %v253
    %v674 = vadd.f32 %v673, %v260
    %v676 = vrot.slane %v585, 7
    %v678 = vmul.f32 %v674, %v676
    %680 = vrot.lane.b32.xlu0 %v674, 64
    %v681 = vpop.permute.xlu0 %680
    %v683 = vmul.f32 %v674, %v681
    %685 = vrot.lane.b32.xlu0 %v683, 32
    %v686 = vpop.permute.xlu0 %685
    %v688 = vadd.f32 %v678, %v686
    %v689 = vtanh.pop %v688
    %691 = vrot.lane.b32.xlu0 %v689, 64
    %v692 = vpop.permute.xlu0 %691
    %v694 = vmul.f32 %v674, %v692
    %v696 = vrot.slane %v694, 5
    %697 = vrot.lane.b32.xlu0 %v696, 32
    %v698 = vpop.permute.xlu0 %697
    %v699 = vsel %vm74, %v698, 0
    %701 = vmatprep.subr.mxu0 0.0
    %702 = vmatpush1.msra.mxu0 %v68
    %703 = vmatprep.subr.mxu0 0.0
    %704 = vmatpush1.msra.mxu0 %v69
    %705 = vmatprep.subr.mxu0 0.0
    %706 = vmatpush1.msra.mxu0 %v70
    %707 = vmatprep.subr.mxu0 0.0
    %708 = vmatpush1.msra.mxu0 %v71
    %709 = vmatprep.subr.mxu0 0.0
    %710 = vmatpush1.msra.mxu0 0.0
    %711 = vmatprep.subr.mxu0 0.0
    %712 = vmatpush1.msra.mxu0 0.0
    %713 = vmatprep.subr.mxu0 0.0
    %714 = vmatpush1.msra.mxu0 0.0
    %715 = vmatprep.subr.mxu0 0.0
    %716 = vmatpush1.msra.mxu0 0.0
    %717 = vmatprep.subr.mxu0 0.0
    %718 = vmatpush1.msra.mxu0 0.0
    %719 = vmatprep.subr.mxu0 0.0
    %720 = vmatpush1.msra.mxu0 0.0
    %721 = vmatprep.subr.mxu0 0.0
    %722 = vmatpush1.msra.mxu0 0.0
    %723 = vmatprep.subr.mxu0 0.0
    %724 = vmatpush1.msra.mxu0 0.0
    %725 = vmatprep.subr.mxu0 0.0
    %726 = vmatpush1.msra.mxu0 0.0
    %727 = vmatprep.subr.mxu0 0.0
    %728 = vmatpush1.msra.mxu0 0.0
    %729 = vmatprep.subr.mxu0 0.0
    %730 = vmatpush1.msra.mxu0 0.0
    %731 = vmatprep.subr.mxu0 0.0
    %732 = vmatpush1.msra.mxu0 0.0
    %733 = vmatprep.subr.mxu0 0.0
    %734 = vmatpush1.msra.mxu0 0.0
    %735 = vmatprep.subr.mxu0 0.0
    %736 = vmatpush1.msra.mxu0 0.0
    %737 = vmatprep.subr.mxu0 0.0
    %738 = vmatpush1.msra.mxu0 0.0
    %739 = vmatprep.subr.mxu0 0.0
    %740 = vmatpush1.msra.mxu0 0.0
    %741 = vmatprep.subr.mxu0 0.0
    %742 = vmatpush1.msra.mxu0 0.0
    %743 = vmatprep.subr.mxu0 0.0
    %744 = vmatpush1.msra.mxu0 0.0
    %745 = vmatprep.subr.mxu0 0.0
    %746 = vmatpush1.msra.mxu0 0.0
    %747 = vmatprep.subr.mxu0 0.0
    %748 = vmatpush1.msra.mxu0 0.0
    %749 = vmatprep.subr.mxu0 0.0
    %750 = vmatpush1.msra.mxu0 0.0
    %751 = vmatprep.subr.mxu0 0.0
    %752 = vmatpush1.msra.mxu0 0.0
    %753 = vmatprep.subr.mxu0 0.0
    %754 = vmatpush1.msra.mxu0 0.0
    %755 = vmatprep.subr.mxu0 0.0
    %756 = vmatpush1.msra.mxu0 0.0
    %757 = vmatprep.subr.mxu0 0.0
    %758 = vmatpush1.msra.mxu0 0.0
    %759 = vmatprep.subr.mxu0 0.0
    %760 = vmatpush1.msra.mxu0 0.0
    %761 = vmatprep.subr.mxu0 0.0
    %762 = vmatpush1.msra.mxu0 0.0
    %763 = vmatprep.subr.mxu0 0.0
    %764 = vmatpush1.msra.mxu0 0.0
    %765 = vmatprep.mubr.f32.mxu0 0.0
    %766 = vmatmul.mubr.f32.gmra.mrb[0].mxu0 %v699
    %v767 = vpop.f32.mrb[0].mxu0
    %v768 = vadd.f32 0.0, %v767
    %v769 = vpop.f32.mrb[0].mxu0
    %770 = vdwg.mxu0
    %v772 = vrot.slane %v768, 2
    %v774 = vadd.f32 %v67, %v772
    %v775 = vtanh.pop %v774
    %v776 = vmul.f32 %v775, %v253
    %v777 = vadd.f32 %v776, %v260
    %v779 = vrot.slane %v688, 7
    %v781 = vmul.f32 %v777, %v779
    %783 = vrot.lane.b32.xlu0 %v777, 64
    %v784 = vpop.permute.xlu0 %783
    %v786 = vmul.f32 %v777, %v784
    %788 = vrot.lane.b32.xlu0 %v786, 32
    %v789 = vpop.permute.xlu0 %788
    %v791 = vadd.f32 %v781, %v789
    %v792 = vtanh.pop %v791
    %794 = vrot.lane.b32.xlu0 %v792, 64
    %v795 = vpop.permute.xlu0 %794
    %v797 = vmul.f32 %v777, %v795
    %v799 = vrot.slane %v797, 6
    %800 = vrot.lane.b32.xlu0 %v799, 32
    %v801 = vpop.permute.xlu0 %800
    %v802 = vsel %vm74, %v801, 0
    %804 = vmatprep.subr.mxu0 0.0
    %805 = vmatpush1.msra.mxu0 %v68
    %806 = vmatprep.subr.mxu0 0.0
    %807 = vmatpush1.msra.mxu0 %v69
    %808 = vmatprep.subr.mxu0 0.0
    %809 = vmatpush1.msra.mxu0 %v70
    %810 = vmatprep.subr.mxu0 0.0
    %811 = vmatpush1.msra.mxu0 %v71
    %812 = vmatprep.subr.mxu0 0.0
    %813 = vmatpush1.msra.mxu0 0.0
    %814 = vmatprep.subr.mxu0 0.0
    %815 = vmatpush1.msra.mxu0 0.0
    %816 = vmatprep.subr.mxu0 0.0
    %817 = vmatpush1.msra.mxu0 0.0
    %818 = vmatprep.subr.mxu0 0.0
    %819 = vmatpush1.msra.mxu0 0.0
    %820 = vmatprep.subr.mxu0 0.0
    %821 = vmatpush1.msra.mxu0 0.0
    %822 = vmatprep.subr.mxu0 0.0
    %823 = vmatpush1.msra.mxu0 0.0
    %824 = vmatprep.subr.mxu0 0.0
    %825 = vmatpush1.msra.mxu0 0.0
    %826 = vmatprep.subr.mxu0 0.0
    %827 = vmatpush1.msra.mxu0 0.0
    %828 = vmatprep.subr.mxu0 0.0
    %829 = vmatpush1.msra.mxu0 0.0
    %830 = vmatprep.subr.mxu0 0.0
    %831 = vmatpush1.msra.mxu0 0.0
    %832 = vmatprep.subr.mxu0 0.0
    %833 = vmatpush1.msra.mxu0 0.0
    %834 = vmatprep.subr.mxu0 0.0
    %835 = vmatpush1.msra.mxu0 0.0
    %836 = vmatprep.subr.mxu0 0.0
    %837 = vmatpush1.msra.mxu0 0.0
    %838 = vmatprep.subr.mxu0 0.0
    %839 = vmatpush1.msra.mxu0 0.0
    %840 = vmatprep.subr.mxu0 0.0
    %841 = vmatpush1.msra.mxu0 0.0
    %842 = vmatprep.subr.mxu0 0.0
    %843 = vmatpush1.msra.mxu0 0.0
    %844 = vmatprep.subr.mxu0 0.0
    %845 = vmatpush1.msra.mxu0 0.0
    %846 = vmatprep.subr.mxu0 0.0
    %847 = vmatpush1.msra.mxu0 0.0
    %848 = vmatprep.subr.mxu0 0.0
    %849 = vmatpush1.msra.mxu0 0.0
    %850 = vmatprep.subr.mxu0 0.0
    %851 = vmatpush1.msra.mxu0 0.0
    %852 = vmatprep.subr.mxu0 0.0
    %853 = vmatpush1.msra.mxu0 0.0
    %854 = vmatprep.subr.mxu0 0.0
    %855 = vmatpush1.msra.mxu0 0.0
    %856 = vmatprep.subr.mxu0 0.0
    %857 = vmatpush1.msra.mxu0 0.0
    %858 = vmatprep.subr.mxu0 0.0
    %859 = vmatpush1.msra.mxu0 0.0
    %860 = vmatprep.subr.mxu0 0.0
    %861 = vmatpush1.msra.mxu0 0.0
    %862 = vmatprep.subr.mxu0 0.0
    %863 = vmatpush1.msra.mxu0 0.0
    %864 = vmatprep.subr.mxu0 0.0
    %865 = vmatpush1.msra.mxu0 0.0
    %866 = vmatprep.subr.mxu0 0.0
    %867 = vmatpush1.msra.mxu0 0.0
    %868 = vmatprep.mubr.f32.mxu0 0.0
    %869 = vmatmul.mubr.f32.gmra.mrb[0].mxu0 %v802
    %v870 = vpop.f32.mrb[0].mxu0
    %v871 = vadd.f32 0.0, %v870
    %v872 = vpop.f32.mrb[0].mxu0
    %873 = vdwg.mxu0
    %v875 = vrot.slane %v871, 1
    %v877 = vadd.f32 %v67, %v875
    %v878 = vtanh.pop %v877
    %v879 = vmul.f32 %v878, %v253
    %v880 = vadd.f32 %v879, %v260
    %v882 = vrot.slane %v791, 7
    %v884 = vmul.f32 %v880, %v882
    %886 = vrot.lane.b32.xlu0 %v880, 64
    %v887 = vpop.permute.xlu0 %886
    %v889 = vmul.f32 %v880, %v887
    %891 = vrot.lane.b32.xlu0 %v889, 32
    %v892 = vpop.permute.xlu0 %891
    %v894 = vadd.f32 %v884, %v892
    %v895 = vtanh.pop %v894
    %897 = vrot.lane.b32.xlu0 %v895, 64
    %v898 = vpop.permute.xlu0 %897
    %v900 = vmul.f32 %v880, %v898
    %v901 = vld [vmem:[%s6] sm:$0x1]
    %v903 = vlaneseq
    %v904 = vshrl.u32 %v903, 7
    %v905 = vsub.s32 0, %v904
    %v906 = vrot.slane %v901, %v905
    %907 = vrot.lane.b32.xlu0 %v906, 96
    %v908 = vpop.permute.xlu0 %907
    %v910 = vmul.f32 %v900, %v908
    %912 = vrot.lane.b32.xlu0 %v910, 32
    %v913 = vpop.permute.xlu0 %912
    %vm915 = vcmask 261127
    %v916 = vsel %vm915, %v913, 0.0
    %917 = vadd.xlane.f32.xlu0 %v916
    %v918 = vpop.xlane.xlu0 %917
    %v919 = vld [vmem:[#allocation2] sm:$0x1]
    %v921 = vlaneseq
    %v922 = vshrl.u32 %v921, 7
    %v923 = vsub.s32 0, %v922
    %v924 = vrot.slane %v919, %v923
    %v926 = vadd.f32 %v918, %v924
    %vm927 = vcmask 7175
    %928 = vst.msk [vmem:[#allocation6 - $0x7] sm:$0x80] %vm927, %v926
    // Predicated region
    $region38: #{lstm_forward_packed.1} parent=1 // pred_check
      _
    $region39: #{lstm_forward_packed.1} parent=1 // pred_check_branch
      %930 = sbr.rel (0) target = $region41
    $region40: #{lstm_forward_packed.1} parent=1 // pred_region
      %s932 = ssub.s32 16, 16
      %933 = vsyncadd [#allocation5], %s932
      %s935 = sshll.u32 [#allocation6], 4
      %s936 = int_to_ptr.vmem [resolvable:$true] %s935
      %938 = dma.vmem_to_hbm [thread:$0]  %s936, 16, %s8, [#allocation5]
    $region41: #{lstm_forward_packed.1} parent=1 // pred_fallthru
      _
    // Predicated region
    $region42: #{lstm_forward_packed.1} parent=1 // pred_check
      _
    $region43: #{lstm_forward_packed.1} parent=1 // pred_check_branch
      %940 = sbr.rel (0) target = $region45
    $region44: #{lstm_forward_packed.1} parent=1 // pred_region
      %941 = dma.done [#allocation5], 16
    $region45: #{lstm_forward_packed.1} parent=1 // pred_fallthru
      _
    %942 = vsyncpa [#allocation4], 1
    %943 = vsyncpa [#allocation5], 1

</llo_original>
